<compile_context>
chip_gen: v7x
topology: tpu7x:2x2x1
jax: 0.10.0
libtpu: 0.0.40
codegen_flags: <defaults>
</compile_context>

<pallas_src>
import functools

import jax
import jax.numpy as jnp
from jax.experimental import pallas as pl
from jax.experimental.pallas import tpu as pltpu


def _round_up(n, m):
    return ((n + m - 1) // m) * m


def _mlp_kernel(x_ref, w1_ref, b1_ref, w2_ref, b2_ref, o_ref):
    """One batch tile: out = sigmoid(x @ W1 + b1) @ W2 + b2 (eval-mode Dropout = id)."""
    x = x_ref[...]          # [tb, 4]   f32
    w1 = w1_ref[...]        # [4, 128]  f32

    # Layer 1 on the VPU: K=4 is far too shallow for the MXU, so do 4
    # broadcast-FMAs over [tb, 128] vregs (frees the MXU for layer 2).
    h = b1_ref[...]                       # [1, 128], broadcasts over the tile
    h = h + x[:, 0:1] * w1[0:1, :]
    h = h + x[:, 1:2] * w1[1:2, :]
    h = h + x[:, 2:3] * w1[2:3, :]
    h = h + x[:, 3:4] * w1[3:4, :]
    z = jax.nn.sigmoid(h)                 # f32 elementwise/EUP (v5e-safe)

    # Layer 2 on the MXU: operands may be bf16, accumulation stays f32.
    out = jnp.dot(z.astype(w2_ref.dtype), w2_ref[...],
                  preferred_element_type=jnp.float32)
    o_ref[...] = (out + b2_ref[...]).astype(o_ref.dtype)   # [tb, 128] lane-dense store


@functools.partial(jax.jit, static_argnames=("tb", "matmul_dtype"))
def mlp_forward(x, w1, b1, w2, b2, *, tb=512, matmul_dtype=jnp.bfloat16):
    """x: [B, 4] f32 -> [B, n_out] f32.

    Weights are stored transposed w.r.t. PyTorch: w1 [4, H], w2 [H, n_out];
    biases b1 [1, H] (or [H]), b2 [1, n_out] (or [n_out]).
    """
    B, in_features = x.shape
    H = w1.shape[1]
    n_out = w2.shape[1]
    b1 = b1.reshape(1, H).astype(jnp.float32)
    b2 = b2.reshape(1, n_out).astype(jnp.float32)

    # ---- pad to lane-friendly shapes (zeros keep the math identical) -------
    hp = _round_up(H, 128)        # 100 -> 128
    op = _round_up(n_out, 128)    # 3   -> 128
    w1p = jnp.pad(w1.astype(jnp.float32), ((0, 0), (0, hp - H)))
    b1p = jnp.pad(b1, ((0, 0), (0, hp - H)))
    # zero-padded W2 rows ensure sigmoid(0 + b1_pad) never leaks into the output
    w2p = jnp.pad(w2, ((0, hp - H), (0, op - n_out))).astype(matmul_dtype)
    b2p = jnp.pad(b2, ((0, 0), (0, op - n_out)))

    # ---- batch tiling -------------------------------------------------------
    tb = _round_up(min(tb, _round_up(B, 8)), 8)
    bp = _round_up(B, tb)
    xp = jnp.pad(x.astype(jnp.float32), ((0, bp - B), (0, 0)))
    grid = (bp // tb,)

    cost = pl.CostEstimate(
        flops=2 * bp * (in_features * hp + hp * op),
        transcendentals=bp * hp,
        bytes_accessed=(xp.size * 4 + w1p.size * 4 + b1p.size * 4
                        + w2p.size * w2p.dtype.itemsize + b2p.size * 4
                        + bp * op * 4),
    )

    out_padded = pl.pallas_call(
        _mlp_kernel,
        out_shape=jax.ShapeDtypeStruct((bp, op), jnp.float32),
        grid_spec=pltpu.PrefetchScalarGridSpec(
            num_scalar_prefetch=0,
            grid=grid,
            in_specs=[
                pl.BlockSpec((tb, in_features), lambda i: (i, 0)),  # batch tile (pipelined)
                pl.BlockSpec((in_features, hp), lambda i: (0, 0)),  # W1: VMEM-resident
                pl.BlockSpec((1, hp), lambda i: (0, 0)),            # b1: VMEM-resident
                pl.BlockSpec((hp, op), lambda i: (0, 0)),           # W2: VMEM-resident
                pl.BlockSpec((1, op), lambda i: (0, 0)),            # b2: VMEM-resident
            ],
            out_specs=pl.BlockSpec((tb, op), lambda i: (i, 0)),     # lane-dense output
        ),
        compiler_params=pltpu.CompilerParams(
            dimension_semantics=("parallel",),
        ),
        cost_estimate=cost,
    )(xp, w1p, b1p, w2p, b2p)

    return out_padded[:B, :n_out]


def init_params(key, in_features=4, hidden=100, n_out=3):
    """Deterministic init mimicking PyTorch's default Linear init
    (uniform(-1/sqrt(fan_in), +1/sqrt(fan_in))), stored transposed ([in, out])."""
    k1, k2, k3, k4 = jax.random.split(key, 4)
    bound1 = 1.0 / jnp.sqrt(in_features)
    bound2 = 1.0 / jnp.sqrt(hidden)
    w1 = jax.random.uniform(k1, (in_features, hidden), jnp.float32, -bound1, bound1)
    b1 = jax.random.uniform(k2, (1, hidden), jnp.float32, -bound1, bound1)
    w2 = jax.random.uniform(k3, (hidden, n_out), jnp.float32, -bound2, bound2)
    b2 = jax.random.uniform(k4, (1, n_out), jnp.float32, -bound2, bound2)
    return w1, b1, w2, b2


def mlp_ref(x, w1, b1, w2, b2):
    """Pure-JAX f32 reference for the correctness check."""
    z = jax.nn.sigmoid(x @ w1 + b1)
    return z @ w2 + b2


if __name__ == "__main__":
    key = jax.random.PRNGKey(0)
    k_x, k_p = jax.random.split(key)

    batch = 16
    x = jax.random.normal(k_x, (batch, 4), jnp.float32)
    w1, b1, w2, b2 = init_params(k_p)

    # tb=8 exercises a multi-step (pipelined) batch grid even at this demo size;
    # production uses the default tb=512.
    out = mlp_forward(x, w1, b1, w2, b2, tb=8)
    out = jax.block_until_ready(out)

    ref = mlp_ref(x, w1, b1, w2, b2)
    assert out.shape == (batch, 3)
    # bf16 MXU operands with f32 accumulation -> loose-but-meaningful tolerance.
    assert jnp.allclose(out, ref, atol=5e-2, rtol=5e-2), "mismatch vs reference"

    print("KERNEL_OK")
</pallas_src>

<mosaic_0001>
module attributes {stable_mosaic.version = 11 : i64} {
  func.func @_mlp_kernel(%arg0: i32, %arg1: memref<8x4xf32, #tpu.memory_space<vmem>>, %arg2: memref<4x128xf32, #tpu.memory_space<vmem>>, %arg3: memref<1x128xf32, #tpu.memory_space<vmem>>, %arg4: memref<128x128xbf16, #tpu.memory_space<vmem>>, %arg5: memref<1x128xf32, #tpu.memory_space<vmem>>, %arg6: memref<8x128xf32, #tpu.memory_space<vmem>>) attributes {dimension_semantics = [#tpu.dimension_semantics<parallel>], iteration_bounds = array<i64: 2>, scalar_prefetch = 0 : i64, scratch_operands = 0 : i64, tpu.core_type = #tpu.core_type<tc>, window_params = [{transform_indices = @transform_0, window_bounds = array<i64: 8, 4>}, {pipeline_mode = #tpu.pipeline_mode<synchronous>, transform_indices = @transform_1, window_bounds = array<i64: 4, 128>}, {pipeline_mode = #tpu.pipeline_mode<synchronous>, transform_indices = @transform_2, window_bounds = array<i64: 1, 128>}, {pipeline_mode = #tpu.pipeline_mode<synchronous>, transform_indices = @transform_3, window_bounds = array<i64: 128, 128>}, {pipeline_mode = #tpu.pipeline_mode<synchronous>, transform_indices = @transform_4, window_bounds = array<i64: 1, 128>}, {transform_indices = @transform_5, window_bounds = array<i64: 8, 128>}]} {
    %c0 = arith.constant 0 : index
    %c0_0 = arith.constant 0 : index
    %0 = vector.load %arg1[%c0, %c0_0] : memref<8x4xf32, #tpu.memory_space<vmem>>, vector<8x4xf32>
    %c0_1 = arith.constant 0 : index
    %c0_2 = arith.constant 0 : index
    %1 = vector.load %arg2[%c0_1, %c0_2] : memref<4x128xf32, #tpu.memory_space<vmem>>, vector<4x128xf32>
    %c0_3 = arith.constant 0 : index
    %c0_4 = arith.constant 0 : index
    %2 = vector.load %arg3[%c0_3, %c0_4] : memref<1x128xf32, #tpu.memory_space<vmem>>, vector<1x128xf32>
    %3 = vector.extract_strided_slice %0 {offsets = [0, 0], sizes = [8, 1], strides = [1, 1]} : vector<8x4xf32> to vector<8x1xf32>
    %4 = vector.extract_strided_slice %1 {offsets = [0, 0], sizes = [1, 128], strides = [1, 1]} : vector<4x128xf32> to vector<1x128xf32>
    %5 = vector.broadcast %3 : vector<8x1xf32> to vector<8x128xf32>
    %6 = vector.broadcast %4 : vector<1x128xf32> to vector<8x128xf32>
    %7 = arith.mulf %5, %6 : vector<8x128xf32>
    %8 = vector.broadcast %2 : vector<1x128xf32> to vector<8x128xf32>
    %9 = arith.addf %8, %7 : vector<8x128xf32>
    %10 = vector.extract_strided_slice %0 {offsets = [0, 1], sizes = [8, 1], strides = [1, 1]} : vector<8x4xf32> to vector<8x1xf32>
    %11 = vector.extract_strided_slice %1 {offsets = [1, 0], sizes = [1, 128], strides = [1, 1]} : vector<4x128xf32> to vector<1x128xf32>
    %12 = vector.broadcast %10 : vector<8x1xf32> to vector<8x128xf32>
    %13 = vector.broadcast %11 : vector<1x128xf32> to vector<8x128xf32>
    %14 = arith.mulf %12, %13 : vector<8x128xf32>
    %15 = arith.addf %9, %14 : vector<8x128xf32>
    %16 = vector.extract_strided_slice %0 {offsets = [0, 2], sizes = [8, 1], strides = [1, 1]} : vector<8x4xf32> to vector<8x1xf32>
    %17 = vector.extract_strided_slice %1 {offsets = [2, 0], sizes = [1, 128], strides = [1, 1]} : vector<4x128xf32> to vector<1x128xf32>
    %18 = vector.broadcast %16 : vector<8x1xf32> to vector<8x128xf32>
    %19 = vector.broadcast %17 : vector<1x128xf32> to vector<8x128xf32>
    %20 = arith.mulf %18, %19 : vector<8x128xf32>
    %21 = arith.addf %15, %20 : vector<8x128xf32>
    %22 = vector.extract_strided_slice %0 {offsets = [0, 3], sizes = [8, 1], strides = [1, 1]} : vector<8x4xf32> to vector<8x1xf32>
    %23 = vector.extract_strided_slice %1 {offsets = [3, 0], sizes = [1, 128], strides = [1, 1]} : vector<4x128xf32> to vector<1x128xf32>
    %24 = vector.broadcast %22 : vector<8x1xf32> to vector<8x128xf32>
    %25 = vector.broadcast %23 : vector<1x128xf32> to vector<8x128xf32>
    %26 = arith.mulf %24, %25 : vector<8x128xf32>
    %27 = arith.addf %21, %26 : vector<8x128xf32>
    %28 = arith.negf %27 : vector<8x128xf32>
    %29 = math.exp %28 : vector<8x128xf32>
    %cst = arith.constant 1.000000e+00 : f32
    %30 = vector.broadcast %cst : f32 to vector<8x128xf32>
    %31 = arith.addf %30, %29 : vector<8x128xf32>
    %32 = arith.divf %30, %31 : vector<8x128xf32>
    %33 = arith.truncf %32 : vector<8x128xf32> to vector<8x128xbf16>
    %c0_5 = arith.constant 0 : index
    %c0_6 = arith.constant 0 : index
    %34 = vector.load %arg4[%c0_5, %c0_6] : memref<128x128xbf16, #tpu.memory_space<vmem>>, vector<128x128xbf16>
    %cst_7 = arith.constant dense<0.000000e+00> : vector<8x128xf32>
    %35 = tpu.matmul %33, %34, %cst_7 {dimension_numbers = #tpu.dot_dimension_numbers<[1], [0], [0], [1], [0, 0, 1, 1], [], []>} : vector<8x128xbf16>, vector<128x128xbf16>, vector<8x128xf32> -> vector<8x128xf32>
    %c0_8 = arith.constant 0 : index
    %c0_9 = arith.constant 0 : index
    %36 = vector.load %arg5[%c0_8, %c0_9] : memref<1x128xf32, #tpu.memory_space<vmem>>, vector<1x128xf32>
    %37 = vector.broadcast %36 : vector<1x128xf32> to vector<8x128xf32>
    %38 = arith.addf %35, %37 : vector<8x128xf32>
    %c0_10 = arith.constant 0 : index
    %c0_11 = arith.constant 0 : index
    %39 = vector.load %arg6[%c0_10, %c0_11] : memref<8x128xf32, #tpu.memory_space<vmem>>, vector<8x128xf32>
    tpu.vector_store %arg6[%c0_10, %c0_11], %38 {strides = array<i32>} : memref<8x128xf32, #tpu.memory_space<vmem>>, vector<8x128xf32>,
    return
  }
  func.func @transform_0(%arg0: i32) -> (i32, i32) {
    %c0_i32 = arith.constant 0 : i32
    %c0_i32_0 = arith.constant 0 : i32
    return %arg0, %c0_i32 : i32, i32
  }
  func.func @transform_1(%arg0: i32) -> (i32, i32) {
    %c0_i32 = arith.constant 0 : i32
    %c0_i32_0 = arith.constant 0 : i32
    %c0_i32_1 = arith.constant 0 : i32
    return %c0_i32, %c0_i32_0 : i32, i32
  }
  func.func @transform_2(%arg0: i32) -> (i32, i32) {
    %c0_i32 = arith.constant 0 : i32
    %c0_i32_0 = arith.constant 0 : i32
    %c0_i32_1 = arith.constant 0 : i32
    return %c0_i32, %c0_i32_0 : i32, i32
  }
  func.func @transform_3(%arg0: i32) -> (i32, i32) {
    %c0_i32 = arith.constant 0 : i32
    %c0_i32_0 = arith.constant 0 : i32
    %c0_i32_1 = arith.constant 0 : i32
    return %c0_i32, %c0_i32_0 : i32, i32
  }
  func.func @transform_4(%arg0: i32) -> (i32, i32) {
    %c0_i32 = arith.constant 0 : i32
    %c0_i32_0 = arith.constant 0 : i32
    %c0_i32_1 = arith.constant 0 : i32
    return %c0_i32, %c0_i32_0 : i32, i32
  }
  func.func @transform_5(%arg0: i32) -> (i32, i32) {
    %c0_i32 = arith.constant 0 : i32
    %c0_i32_0 = arith.constant 0 : i32
    return %arg0, %c0_i32 : i32, i32
  }
}

</mosaic_0001>

<llo_original>
// kernel: mlp_forward.1
$region0: #{mlp_forward.1}
  #allocation0 [shape = 'u32[]', space=smem, size = 0x4, offset = 0x4, fixed_abs, tag = 'smem constant byte address 0x4 - core index']
  #allocation1 [shape = 'u32[144,128]{1,0:T(1,128)}', space=vmem, size = 0x12000, scoped, tag = 'internal scratch']
  %s0 = inlined_call_operand.vmem [shape: f32[16,4], index: 0, kind: input, shape index: {}]
  %s1 = inlined_call_operand.vmem [shape: f32[4,128], index: 1, kind: input, shape index: {}]
  %s2 = inlined_call_operand.vmem [shape: f32[1,128], index: 2, kind: input, shape index: {}]
  %s3 = inlined_call_operand.vmem [shape: bf16[128,128], index: 3, kind: input, shape index: {}]
  %s4 = inlined_call_operand.vmem [shape: f32[1,128], index: 4, kind: input, shape index: {}]
  %s5 = inlined_call_operand.vmem [shape: f32[16,128], index: 5, kind: output, shape index: {}]
  %s6 = sld [smem:[#allocation0]]
  $region53: #{mlp_forward.1} parent=0
    _
  %s8 = ssub.s32 1, %s6
  %s9 = scalar_select 0, %s8, %s6
  loop: start=0, step=1, limit=4
  $region2: #{mlp_forward.1} parent=0 // loop_pre_header
    _
  $region3: #{mlp_forward.1} parent=0 // loop_header
    %s11 = sphi 0, %s15
    %p12 = scmp.ge.s32.totalorder %s11, 4
    %s21 = sphi 0, %s23
    %s24 = sphi 0, %s21
    %s25 = sphi 0, %s24
    %s41 = sphi 0, %s25
    %s45 = sphi 0, %s45
    %s47 = sphi 0, %s45
    %s48 = sphi 0, %s47
    %s62 = sphi 0, %s48
    %s66 = sphi 0, %s66
    %s68 = sphi 0, %s66
    %s69 = sphi 0, %s68
    %s83 = sphi 0, %s69
    %s87 = sphi 0, %s87
    %s89 = sphi 0, %s87
    %s90 = sphi 0, %s89
    %s104 = sphi 0, %s90
    %s108 = sphi 0, %s108
    %s110 = sphi 0, %s108
    %s111 = sphi 0, %s110
    %s125 = sphi 0, %s111
    %s131 = sphi 0, %s133
    %s134 = sphi 0, %s131
    %s135 = sphi 0, %s134
    %s151 = sphi 0, %s135
  $region4: #{mlp_forward.1} parent=0 // loop_header_branch
    %14 = sbr.rel (%p12) target = $region8
  $region5: #{mlp_forward.1} parent=0 // loop_body
    %s16 = ssub.s32 %s11, 1
    %s17 = ssub.s32 %s11, 2
    %s18 = sadd.s32 %s11, 1
    %s19 = ssub.s32 %s11, %s18
    %p20 = scmp.eq.s32.totalorder %s19, 0
    %s22 = sadd.s32 %s21, 1
    %s23 = scalar_select %p20, %s21, %s22
    %p26 = pneg %p20
    %p27 = scmp.eq.s32.totalorder %s11, 1
    %p28 = por %p26, %p27
    %p29 = scmp.ne.s32.totalorder %s21, %s24
    %p30 = scmp.eq.s32.totalorder %s11, 0
    %p31 = por %p29, %p30
    %p32 = scmp.ne.s32.totalorder %s21, %s24
    %p33 = scmp.eq.s32.totalorder %s16, 1
    %p34 = por %p32, %p33
    %p35 = scmp.ne.s32.totalorder %s24, %s25
    %p36 = scmp.eq.s32.totalorder %s16, 0
    %p37 = por %p35, %p36
    %p38 = scmp.ne.s32.totalorder %s24, %s25
    %p39 = scmp.eq.s32.totalorder %s17, 1
    %p40 = por %p38, %p39
    %p42 = scmp.ne.s32.totalorder %s25, %s41
    %p43 = scmp.eq.s32.totalorder %s17, 0
    %p44 = por %p42, %p43
    %s46 = sadd.s32 %s45, 1
    %p49 = scmp.eq.s32.totalorder %s11, 1
    %p50 = scmp.ne.s32.totalorder %s45, %s47
    %p51 = scmp.eq.s32.totalorder %s11, 0
    %p52 = por %p50, %p51
    %p53 = scmp.ne.s32.totalorder %s45, %s47
    %p54 = scmp.eq.s32.totalorder %s16, 1
    %p55 = por %p53, %p54
    %p56 = scmp.ne.s32.totalorder %s47, %s48
    %p57 = scmp.eq.s32.totalorder %s16, 0
    %p58 = por %p56, %p57
    %p59 = scmp.ne.s32.totalorder %s47, %s48
    %p60 = scmp.eq.s32.totalorder %s17, 1
    %p61 = por %p59, %p60
    %p63 = scmp.ne.s32.totalorder %s48, %s62
    %p64 = scmp.eq.s32.totalorder %s17, 0
    %p65 = por %p63, %p64
    %s67 = sadd.s32 %s66, 1
    %p70 = scmp.eq.s32.totalorder %s11, 1
    %p71 = scmp.ne.s32.totalorder %s66, %s68
    %p72 = scmp.eq.s32.totalorder %s11, 0
    %p73 = por %p71, %p72
    %p74 = scmp.ne.s32.totalorder %s66, %s68
    %p75 = scmp.eq.s32.totalorder %s16, 1
    %p76 = por %p74, %p75
    %p77 = scmp.ne.s32.totalorder %s68, %s69
    %p78 = scmp.eq.s32.totalorder %s16, 0
    %p79 = por %p77, %p78
    %p80 = scmp.ne.s32.totalorder %s68, %s69
    %p81 = scmp.eq.s32.totalorder %s17, 1
    %p82 = por %p80, %p81
    %p84 = scmp.ne.s32.totalorder %s69, %s83
    %p85 = scmp.eq.s32.totalorder %s17, 0
    %p86 = por %p84, %p85
    %s88 = sadd.s32 %s87, 1
    %p91 = scmp.eq.s32.totalorder %s11, 1
    %p92 = scmp.ne.s32.totalorder %s87, %s89
    %p93 = scmp.eq.s32.totalorder %s11, 0
    %p94 = por %p92, %p93
    %p95 = scmp.ne.s32.totalorder %s87, %s89
    %p96 = scmp.eq.s32.totalorder %s16, 1
    %p97 = por %p95, %p96
    %p98 = scmp.ne.s32.totalorder %s89, %s90
    %p99 = scmp.eq.s32.totalorder %s16, 0
    %p100 = por %p98, %p99
    %p101 = scmp.ne.s32.totalorder %s89, %s90
    %p102 = scmp.eq.s32.totalorder %s17, 1
    %p103 = por %p101, %p102
    %p105 = scmp.ne.s32.totalorder %s90, %s104
    %p106 = scmp.eq.s32.totalorder %s17, 0
    %p107 = por %p105, %p106
    %s109 = sadd.s32 %s108, 1
    %p112 = scmp.eq.s32.totalorder %s11, 1
    %p113 = scmp.ne.s32.totalorder %s108, %s110
    %p114 = scmp.eq.s32.totalorder %s11, 0
    %p115 = por %p113, %p114
    %p116 = scmp.ne.s32.totalorder %s108, %s110
    %p117 = scmp.eq.s32.totalorder %s16, 1
    %p118 = por %p116, %p117
    %p119 = scmp.ne.s32.totalorder %s110, %s111
    %p120 = scmp.eq.s32.totalorder %s16, 0
    %p121 = por %p119, %p120
    %p122 = scmp.ne.s32.totalorder %s110, %s111
    %p123 = scmp.eq.s32.totalorder %s17, 1
    %p124 = por %p122, %p123
    %p126 = scmp.ne.s32.totalorder %s111, %s125
    %p127 = scmp.eq.s32.totalorder %s17, 0
    %p128 = por %p126, %p127
    %s129 = ssub.s32 %s11, %s18
    %p130 = scmp.eq.s32.totalorder %s129, 0
    %s132 = sadd.s32 %s131, 1
    %s133 = scalar_select %p130, %s131, %s132
    %p136 = pneg %p130
    %p137 = scmp.eq.s32.totalorder %s11, 1
    %p138 = por %p136, %p137
    %p139 = scmp.ne.s32.totalorder %s131, %s134
    %p140 = scmp.eq.s32.totalorder %s11, 0
    %p141 = por %p139, %p140
    %p142 = scmp.ne.s32.totalorder %s131, %s134
    %p143 = scmp.eq.s32.totalorder %s16, 1
    %p144 = por %p142, %p143
    %p145 = scmp.ne.s32.totalorder %s134, %s135
    %p146 = scmp.eq.s32.totalorder %s16, 0
    %p147 = por %p145, %p146
    %p148 = scmp.ne.s32.totalorder %s134, %s135
    %p149 = scmp.eq.s32.totalorder %s17, 1
    %p150 = por %p148, %p149
    %p152 = scmp.ne.s32.totalorder %s135, %s151
    %p153 = scmp.eq.s32.totalorder %s17, 0
    %p154 = por %p152, %p153
    %p155 = scmp.le.s32.totalorder 1, %s11
    %p156 = scmp.lt.s32.totalorder %s11, 3
    %p157 = pnand %p155, %p156
    %p158 = pneg %p157
    // Predicated region
    $region9: #{mlp_forward.1} parent=5 // pred_check
      _
    $region10: #{mlp_forward.1} parent=5 // pred_check_branch
      %160 = sbr.rel (%p157) target = $region12
    $region11: #{mlp_forward.1} parent=5 // pred_region
      %s161 = ssub.s32 %s11, 1
      // Predicated region
      $region13: #{mlp_forward.1} parent=11 // pred_check
        %p162 = pneg %p58
      $region14: #{mlp_forward.1} parent=11 // pred_check_branch
        %164 = sbr.rel (%p162) target = $region16
      $region15: #{mlp_forward.1} parent=11 // pred_region
        _
      $region16: #{mlp_forward.1} parent=11 // pred_fallthru
        _
      // Predicated region
      $region17: #{mlp_forward.1} parent=11 // pred_check
        %p165 = pneg %p79
      $region18: #{mlp_forward.1} parent=11 // pred_check_branch
        %167 = sbr.rel (%p165) target = $region20
      $region19: #{mlp_forward.1} parent=11 // pred_region
        _
      $region20: #{mlp_forward.1} parent=11 // pred_fallthru
        _
      // Predicated region
      $region21: #{mlp_forward.1} parent=11 // pred_check
        %p168 = pneg %p100
      $region22: #{mlp_forward.1} parent=11 // pred_check_branch
        %170 = sbr.rel (%p168) target = $region24
      $region23: #{mlp_forward.1} parent=11 // pred_region
        _
      $region24: #{mlp_forward.1} parent=11 // pred_fallthru
        _
      // Predicated region
      $region25: #{mlp_forward.1} parent=11 // pred_check
        %p171 = pneg %p121
      $region26: #{mlp_forward.1} parent=11 // pred_check_branch
        %173 = sbr.rel (%p171) target = $region28
      $region27: #{mlp_forward.1} parent=11 // pred_region
        _
      $region28: #{mlp_forward.1} parent=11 // pred_fallthru
        _
    $region12: #{mlp_forward.1} parent=5 // pred_fallthru
      _
    %p174 = scmp.lt.s32.totalorder %s11, 2
    // Predicated region
    $region29: #{mlp_forward.1} parent=5 // pred_check
      %p175 = pneg %p174
    $region30: #{mlp_forward.1} parent=5 // pred_check_branch
      %177 = sbr.rel (%p175) target = $region32
    $region31: #{mlp_forward.1} parent=5 // pred_region
      // Predicated region
      $region33: #{mlp_forward.1} parent=31 // pred_check
        %p178 = pneg %p31
      $region34: #{mlp_forward.1} parent=31 // pred_check_branch
        %180 = sbr.rel (%p178) target = $region36
      $region35: #{mlp_forward.1} parent=31 // pred_region
        %p181 = scmp.lt.s32.totalorder %s11, 1
        %s182 = scalar_select %p181, %s11, 1
        %s183 = smul.addr %s182, 8
        %s184 = scalar_lea.vmem %s0, %s183
      $region36: #{mlp_forward.1} parent=31 // pred_fallthru
        _
    $region32: #{mlp_forward.1} parent=5 // pred_fallthru
      _
    %p185 = scmp.le.s32.totalorder 1, %s11
    %p186 = scmp.lt.s32.totalorder %s11, 3
    %p187 = pnand %p185, %p186
    %p188 = pneg %p187
    // Predicated region
    $region37: #{mlp_forward.1} parent=5 // pred_check
      _
    $region38: #{mlp_forward.1} parent=5 // pred_check_branch
      %190 = sbr.rel (%p187) target = $region40
    $region39: #{mlp_forward.1} parent=5 // pred_region
      %s191 = ssub.s32 %s11, 1
      %p192 = scmp.lt.s32.totalorder %s16, 1
      %s193 = scalar_select %p192, %s16, 1
      %s194 = smul.addr %s193, 8
      %s195 = scalar_lea.vmem %s0, %s194
      %p196 = pneg %p37
      %p197 = pneg %p34
      %p198 = pneg %p58
      %p199 = pneg %p55
      %p200 = pneg %p79
      %p201 = pneg %p76
      %p202 = pneg %p100
      %p203 = pneg %p97
      %p204 = pneg %p121
      %p205 = pneg %p118
      %p206 = pneg %p147
      %p207 = pneg %p144
      %p208 = scmp.lt.s32.totalorder %s16, 1
      %s209 = scalar_select %p208, %s16, 1
      %s210 = smul.addr %s209, 8
      %s211 = scalar_lea.vmem %s5, %s210
      %p212 = scmp.lt.s32.totalorder %s16, 1
      %s213 = scalar_select %p212, %s16, 1
      %s214 = smul.addr %s213, 8
      %s215 = scalar_lea.vmem %s0, %s214
      %p216 = scmp.lt.s32.totalorder %s16, 1
      %s217 = scalar_select %p216, %s16, 1
      %s218 = smul.addr %s217, 8
      %s219 = scalar_lea.vmem %s5, %s218
      %v221 = vld [vmem:[%s215] sm:$0xff]
      %v222 = vld [vmem:[%s1] sm:$0xf]
      %v223 = vld [vmem:[%s2] sm:$0x1]
      %225 = vset.pattern.permute.xlu0 0
      %226 = vperm.xlu0 %225, %v221
      %v227 = vpop.permute.xlu0 %226
      %v229 = vlaneseq
      %v230 = vshrl.u32 %v229, 7
      %v231 = vsub.s32 0, %v230
      %v232 = vrot.slane %v222, %v231
      %v233 = vmul.f32 %v227, %v232
      %v235 = vlaneseq
      %v236 = vshrl.u32 %v235, 7
      %v237 = vsub.s32 0, %v236
      %v238 = vrot.slane %v223, %v237
      %v240 = vadd.f32 %v238, %v233
      %241 = vset.pattern.permute.xlu0 1
      %242 = vperm.xlu0 %241, %v221
      %v243 = vpop.permute.xlu0 %242
      %v245 = vlaneseq
      %v246 = vshrl.u32 %v245, 7
      %v247 = vsub.s32 1, %v246
      %v248 = vrot.slane %v222, %v247
      %v249 = vmul.f32 %v243, %v248
      %v250 = vadd.f32 %v240, %v249
      %251 = vset.pattern.permute.xlu0 2
      %252 = vperm.xlu0 %251, %v221
      %v253 = vpop.permute.xlu0 %252
      %v255 = vlaneseq
      %v256 = vshrl.u32 %v255, 7
      %v257 = vsub.s32 2, %v256
      %v258 = vrot.slane %v222, %v257
      %v259 = vmul.f32 %v253, %v258
      %v260 = vadd.f32 %v250, %v259
      %261 = vset.pattern.permute.xlu0 3
      %262 = vperm.xlu0 %261, %v221
      %v263 = vpop.permute.xlu0 %262
      %v265 = vlaneseq
      %v266 = vshrl.u32 %v265, 7
      %v267 = vsub.s32 3, %v266
      %v268 = vrot.slane %v222, %v267
      %v269 = vmul.f32 %v263, %v268
      %v270 = vadd.f32 %v260, %v269
      %v271 = vxor.u32 %v270, 2147483648
      %v272 = vmul.f32 %v271, 1.442695
      %v273 = vpow.pop %v272
      %v274 = vadd.f32 %v273, 1.0
      %v275 = vrcp.pop %v274
      %v276 = vmul.f32 1.0, %v275
      %v277 = vpack.c.bf16 %v276, %v276
      %v278 = vld [vmem:[%s3] sm:$0xf]
      %v279 = vld [vmem:[%s3 + $0x4] sm:$0xf]
      %v280 = vld [vmem:[%s3 + $0x8] sm:$0xf]
      %v281 = vld [vmem:[%s3 + $0xc] sm:$0xf]
      %v282 = vld [vmem:[%s3 + $0x10] sm:$0xf]
      %v283 = vld [vmem:[%s3 + $0x14] sm:$0xf]
      %v284 = vld [vmem:[%s3 + $0x18] sm:$0xf]
      %v285 = vld [vmem:[%s3 + $0x1c] sm:$0xf]
      %v286 = vld [vmem:[%s3 + $0x20] sm:$0xf]
      %v287 = vld [vmem:[%s3 + $0x24] sm:$0xf]
      %v288 = vld [vmem:[%s3 + $0x28] sm:$0xf]
      %v289 = vld [vmem:[%s3 + $0x2c] sm:$0xf]
      %v290 = vld [vmem:[%s3 + $0x30] sm:$0xf]
      %v291 = vld [vmem:[%s3 + $0x34] sm:$0xf]
      %v292 = vld [vmem:[%s3 + $0x38] sm:$0xf]
      %v293 = vld [vmem:[%s3 + $0x3c] sm:$0xf]
      %v294 = vld [vmem:[%s4] sm:$0x1]
      %v296 = vlaneseq
      %v297 = vshrl.u32 %v296, 7
      %v298 = vsub.s32 0, %v297
      %v299 = vrot.slane %v294, %v298
      %v317 = vunpack.c.l.b16 %v278
      %v318 = vunpack.c.l.b16 %v279
      %v319 = vunpack.c.l.b16 %v280
      %v320 = vunpack.c.l.b16 %v281
      %v321 = vunpack.c.l.b16 %v282
      %v322 = vunpack.c.l.b16 %v283
      %v323 = vunpack.c.l.b16 %v284
      %v324 = vunpack.c.l.b16 %v285
      %v325 = vunpack.c.l.b16 %v286
      %v326 = vunpack.c.l.b16 %v287
      %v327 = vunpack.c.l.b16 %v288
      %v328 = vunpack.c.l.b16 %v289
      %v329 = vunpack.c.l.b16 %v290
      %v330 = vunpack.c.l.b16 %v291
      %v331 = vunpack.c.l.b16 %v292
      %v332 = vunpack.c.l.b16 %v293
      %v333 = vpack.c.b16 %v318, %v317
      %v334 = vpack.c.b16 %v320, %v319
      %v335 = vpack.c.b16 %v322, %v321
      %v336 = vpack.c.b16 %v324, %v323
      %v337 = vpack.c.b16 %v326, %v325
      %v338 = vpack.c.b16 %v328, %v327
      %v339 = vpack.c.b16 %v330, %v329
      %v340 = vpack.c.b16 %v332, %v331
      %349 = vmatprep.subr.bf16.mxu0 0
      %350 = vmatpush1.bf16.msra.mxu0 %v333
      %351 = vmatprep.subr.bf16.mxu0 0
      %352 = vmatpush1.bf16.msra.mxu0 %v334
      %353 = vmatprep.subr.bf16.mxu0 0
      %354 = vmatpush1.bf16.msra.mxu0 %v335
      %355 = vmatprep.subr.bf16.mxu0 0
      %356 = vmatpush1.bf16.msra.mxu0 %v336
      %357 = vmatprep.subr.bf16.mxu0 0
      %358 = vmatpush1.bf16.msra.mxu0 %v337
      %359 = vmatprep.subr.bf16.mxu0 0
      %360 = vmatpush1.bf16.msra.mxu0 %v338
      %361 = vmatprep.subr.bf16.mxu0 0
      %362 = vmatpush1.bf16.msra.mxu0 %v339
      %363 = vmatprep.subr.bf16.mxu0 0
      %364 = vmatpush1.bf16.msra.mxu0 %v340
      %365 = vmatprep.subr.bf16.mxu0 0
      %366 = vmatpush1.bf16.msra.mxu0 0
      %367 = vmatprep.subr.bf16.mxu0 0
      %368 = vmatpush1.bf16.msra.mxu0 0
      %369 = vmatprep.subr.bf16.mxu0 0
      %370 = vmatpush1.bf16.msra.mxu0 0
      %371 = vmatprep.subr.bf16.mxu0 0
      %372 = vmatpush1.bf16.msra.mxu0 0
      %373 = vmatprep.subr.bf16.mxu0 0
      %374 = vmatpush1.bf16.msra.mxu0 0
      %375 = vmatprep.subr.bf16.mxu0 0
      %376 = vmatpush1.bf16.msra.mxu0 0
      %377 = vmatprep.subr.bf16.mxu0 0
      %378 = vmatpush1.bf16.msra.mxu0 0
      %379 = vmatprep.subr.bf16.mxu0 0
      %380 = vmatpush1.bf16.msra.mxu0 0
      %381 = vmatprep.mubr.bf16.mxu0 0
      %382 = vmatmul.mubr.bf16.gmra.mrb[0].mxu0 %v277
      %v383 = vpop.f32.mrb[0].mxu0
      %v384 = vadd.f32 %v299, %v383
      %v385 = vpop.f32.mrb[0].mxu0
      %v386 = vpop.f32.mrb[0].mxu0
      %v387 = vpop.f32.mrb[0].mxu0
      %388 = vdwg.mxu0
      %389 = vst [vmem:[%s219] sm:$0xff] %v384
      %p390 = scmp.lt.s32.totalorder %s16, 1
      %s391 = scalar_select %p390, %s16, 1
      %s392 = smul.addr %s391, 8
      %s393 = scalar_lea.vmem %s5, %s392
      // Predicated region
      $region41: #{mlp_forward.1} parent=39 // pred_check
        %p394 = pneg %p144
      $region42: #{mlp_forward.1} parent=39 // pred_check_branch
        %396 = sbr.rel (%p394) target = $region44
      $region43: #{mlp_forward.1} parent=39 // pred_region
        _
      $region44: #{mlp_forward.1} parent=39 // pred_fallthru
        _
    $region40: #{mlp_forward.1} parent=5 // pred_fallthru
      _
    %p397 = scmp.le.s32.totalorder 2, %s11
    // Predicated region
    $region45: #{mlp_forward.1} parent=5 // pred_check
      %p398 = pneg %p397
    $region46: #{mlp_forward.1} parent=5 // pred_check_branch
      %400 = sbr.rel (%p398) target = $region48
    $region47: #{mlp_forward.1} parent=5 // pred_region
      %s401 = ssub.s32 %s11, 2
      // Predicated region
      $region49: #{mlp_forward.1} parent=47 // pred_check
        %p402 = pneg %p150
      $region50: #{mlp_forward.1} parent=47 // pred_check_branch
        %404 = sbr.rel (%p402) target = $region52
      $region51: #{mlp_forward.1} parent=47 // pred_region
        %p405 = scmp.lt.s32.totalorder %s17, 1
        %s406 = scalar_select %p405, %s17, 1
        %s407 = smul.addr %s406, 8
        %s408 = scalar_lea.vmem %s5, %s407
      $region52: #{mlp_forward.1} parent=47 // pred_fallthru
        _
    $region48: #{mlp_forward.1} parent=5 // pred_fallthru
      _
  $region6: #{mlp_forward.1} parent=0 // loop_footer
    %s15 = sadd.s32 1, %s11
  $region7: #{mlp_forward.1} parent=0 // loop_footer_branch
    %10 = sbr.rel target = $region3
  $region8: #{mlp_forward.1} parent=0 // loop_exit
    _

</llo_original>
